<compile_context>
chip_gen: v7x
topology: tpu7x:2x2x1
jax: 0.10.0
libtpu: 0.0.40
codegen_flags: <defaults>
</compile_context>

<pallas_src>
import math

import jax
import jax.numpy as jnp
from jax.experimental import pallas as pl
from jax.experimental.pallas import tpu as pltpu


def _round_up(a, b):
    return -(-a // b) * b


def _lane_group(T, T_out, max_weight_bytes=4 << 20):
    """Rows packed per lane-dense packed row: smallest G with 128 | G*T and
    128 | G*T_out. Fall back to G=1 if the block-diagonal weight would be huge."""
    g_in = 128 // math.gcd(T, 128)
    g_out = 128 // math.gcd(T_out, 128)
    G = g_in * g_out // math.gcd(g_in, g_out)  # lcm(g_in, g_out)
    if (G * T) * (G * T_out) * 2 > max_weight_bytes:  # bf16 resident weight
        return 1
    return G


def _time_reduction_kernel(x_ref, w_ref, b_ref, o_ref):
    # x_ref: (TP, G*T)        f32 packed-rows tile (lane dense, streamed)
    # w_ref: (G*T, G*T_out)   bf16 block-diagonal weight (resident)
    # b_ref: (1, G*T_out)     f32 tiled bias (resident)
    # o_ref: (TP, G*T_out)    f32 packed output tile (lane dense -> unmasked vst)
    x_bf16 = x_ref[...].astype(jnp.bfloat16)          # single-pass MXU operands
    acc = jnp.dot(x_bf16, w_ref[...], preferred_element_type=jnp.float32)
    o_ref[...] = (acc + b_ref[...]).astype(o_ref.dtype)


def time_reduction_ffc(x, weight, bias, *, tm=131072, min_steps=8):
    """x: (B, N, F, T); weight: (T_out, T); bias: (T_out,) -> (B, N, F, T_out)."""
    B, N, Fdim, T = x.shape
    T_out = weight.shape[0]
    M = B * N * Fdim

    G = _lane_group(T, T_out)

    # Round rows up to a multiple of G only (<= G-1 rows; no copy when M % G == 0).
    Mp = _round_up(M, G)
    x2d = x.reshape(M, T)
    if Mp > M:
        # TODO(synk): could fold this tiny pad into the call via allow_input_fusion.
        x2d = jnp.pad(x2d, ((0, Mp - M), (0, 0)))
    xp = x2d.reshape(Mp // G, G * T)          # contiguous (free) lane-dense view
    MP_rows = Mp // G

    # Packed-rows tile: multiple of 8 sublanes; shrink so the grid has >= min_steps
    # steps (pipelining + megacore sharding) whenever possible, capped at `tm`
    # logical rows per step.
    tp_req = max(8, (tm // G // 8) * 8)
    tp_steps = max(8, _round_up(pl.cdiv(MP_rows, min_steps), 8))
    TP = min(tp_req, tp_steps)
    grid_m = pl.cdiv(MP_rows, TP)             # partial last block handled by Pallas

    # Resident block-diagonal bf16 weight + f32 tiled bias.
    w_t = weight.T.astype(jnp.float32)        # (T, T_out)
    if G > 1:
        w_big = jnp.kron(jnp.eye(G, dtype=jnp.float32), w_t)       # (G*T, G*T_out)
        b_big = jnp.tile(bias.astype(jnp.float32), G).reshape(1, G * T_out)
    else:
        w_big = w_t
        b_big = bias.astype(jnp.float32).reshape(1, T_out)
    w_big = w_big.astype(jnp.bfloat16)

    cost = pl.CostEstimate(
        flops=2 * MP_rows * (G * T) * (G * T_out),      # MACs actually executed
        transcendentals=0,
        bytes_accessed=4 * Mp * (T + T_out) + 2 * (G * T) * (G * T_out) + 4 * G * T_out,
    )

    out_p = pl.pallas_call(
        _time_reduction_kernel,
        out_shape=jax.ShapeDtypeStruct((MP_rows, G * T_out), x.dtype),
        grid_spec=pltpu.PrefetchScalarGridSpec(
            num_scalar_prefetch=0,
            grid=(grid_m,),
            in_specs=[
                pl.BlockSpec((TP, G * T), lambda i: (i, 0)),          # streamed x
                pl.BlockSpec((G * T, G * T_out), lambda i: (0, 0)),   # resident W
                pl.BlockSpec((1, G * T_out), lambda i: (0, 0)),       # resident b
            ],
            out_specs=pl.BlockSpec((TP, G * T_out), lambda i: (i, 0)),
        ),
        compiler_params=pltpu.CompilerParams(
            dimension_semantics=("parallel",),
            vmem_limit_bytes=40 << 20,
        ),
        cost_estimate=cost,
    )(xp, w_big, b_big)

    # Unpack (free reshape); slice only in the rare M % G != 0 case.
    out2d = out_p.reshape(Mp, T_out)
    if Mp > M:
        out2d = out2d[:M]
    return out2d.reshape(B, N, Fdim, T_out)


if __name__ == "__main__":
    # Shapes consistent with the module's forward:
    #   B=2, N=4, F=16, in_timesteps=T=8, out_timesteps=4
    B, N, Fdim, T_in, T_out = 2, 4, 16, 8, 4

    key = jax.random.PRNGKey(0)
    kx, kw, kb = jax.random.split(key, 3)

    x = jax.random.normal(kx, (B, N, Fdim, T_in), dtype=jnp.float32)
    # Deterministic parameter init (mimics nn.Linear's uniform fan-in scaling).
    bound = 1.0 / float(T_in) ** 0.5
    weight = jax.random.uniform(kw, (T_out, T_in), jnp.float32, -bound, bound)
    bias = jax.random.uniform(kb, (T_out,), jnp.float32, -bound, bound)

    y = time_reduction_ffc(x, weight, bias)
    y = jax.block_until_ready(y)
    assert y.shape == (B, N, Fdim, T_out)

    # 1) Exact-math reference (PyTorch nn.Linear semantics). The kernel uses
    #    single-pass bf16 MXU operands (per perf review), so compare at bf16-level
    #    tolerance for unit-scale data.
    y_ref = (x.reshape(-1, T_in) @ weight.T + bias).reshape(B, N, Fdim, T_out)
    assert jnp.allclose(y, y_ref, atol=5e-2, rtol=5e-2)

    # 2) Tight reference against the same math the kernel performs
    #    (bf16-rounded operands, f32 accumulation, f32 bias add).
    xb = x.reshape(-1, T_in).astype(jnp.bfloat16).astype(jnp.float32)
    wb = weight.astype(jnp.bfloat16).astype(jnp.float32)
    y_ref_bf16 = (xb @ wb.T + bias).reshape(B, N, Fdim, T_out)
    assert jnp.allclose(y, y_ref_bf16, atol=2e-3, rtol=2e-3)

    print("KERNEL_OK")
</pallas_src>

<mosaic_0001>
module attributes {stable_mosaic.version = 11 : i64} {
  func.func @_time_reduction_kernel(%arg0: i32, %arg1: memref<8x256xf32, #tpu.memory_space<vmem>>, %arg2: memref<256x128xbf16, #tpu.memory_space<vmem>>, %arg3: memref<1x128xf32, #tpu.memory_space<vmem>>, %arg4: memref<8x128xf32, #tpu.memory_space<vmem>>) attributes {dimension_semantics = [#tpu.dimension_semantics<parallel>], iteration_bounds = array<i64: 1>, scalar_prefetch = 0 : i64, scratch_operands = 0 : i64, tpu.core_type = #tpu.core_type<tc>, window_params = [{transform_indices = @transform_0, window_bounds = array<i64: 8, 256>}, {pipeline_mode = #tpu.pipeline_mode<synchronous>, transform_indices = @transform_1, window_bounds = array<i64: 256, 128>}, {pipeline_mode = #tpu.pipeline_mode<synchronous>, transform_indices = @transform_2, window_bounds = array<i64: 1, 128>}, {transform_indices = @transform_3, window_bounds = array<i64: 8, 128>}]} {
    %c0 = arith.constant 0 : index
    %c0_0 = arith.constant 0 : index
    %0 = vector.load %arg1[%c0, %c0_0] : memref<8x256xf32, #tpu.memory_space<vmem>>, vector<8x256xf32>
    %1 = arith.truncf %0 : vector<8x256xf32> to vector<8x256xbf16>
    %c0_1 = arith.constant 0 : index
    %c0_2 = arith.constant 0 : index
    %2 = vector.load %arg2[%c0_1, %c0_2] : memref<256x128xbf16, #tpu.memory_space<vmem>>, vector<256x128xbf16>
    %cst = arith.constant dense<0.000000e+00> : vector<8x128xf32>
    %3 = tpu.matmul %1, %2, %cst {dimension_numbers = #tpu.dot_dimension_numbers<[1], [0], [0], [1], [0, 0, 1, 1], [], []>} : vector<8x256xbf16>, vector<256x128xbf16>, vector<8x128xf32> -> vector<8x128xf32>
    %c0_3 = arith.constant 0 : index
    %c0_4 = arith.constant 0 : index
    %4 = vector.load %arg3[%c0_3, %c0_4] : memref<1x128xf32, #tpu.memory_space<vmem>>, vector<1x128xf32>
    %5 = vector.broadcast %4 : vector<1x128xf32> to vector<8x128xf32>
    %6 = arith.addf %3, %5 : vector<8x128xf32>
    %c0_5 = arith.constant 0 : index
    %c0_6 = arith.constant 0 : index
    %7 = vector.load %arg4[%c0_5, %c0_6] : memref<8x128xf32, #tpu.memory_space<vmem>>, vector<8x128xf32>
    tpu.vector_store %arg4[%c0_5, %c0_6], %6 {strides = array<i32>} : memref<8x128xf32, #tpu.memory_space<vmem>>, vector<8x128xf32>,
    return
  }
  func.func @transform_0(%arg0: i32) -> (i32, i32) {
    %c0_i32 = arith.constant 0 : i32
    %c0_i32_0 = arith.constant 0 : i32
    return %arg0, %c0_i32 : i32, i32
  }
  func.func @transform_1(%arg0: i32) -> (i32, i32) {
    %c0_i32 = arith.constant 0 : i32
    %c0_i32_0 = arith.constant 0 : i32
    %c0_i32_1 = arith.constant 0 : i32
    return %c0_i32, %c0_i32_0 : i32, i32
  }
  func.func @transform_2(%arg0: i32) -> (i32, i32) {
    %c0_i32 = arith.constant 0 : i32
    %c0_i32_0 = arith.constant 0 : i32
    %c0_i32_1 = arith.constant 0 : i32
    return %c0_i32, %c0_i32_0 : i32, i32
  }
  func.func @transform_3(%arg0: i32) -> (i32, i32) {
    %c0_i32 = arith.constant 0 : i32
    %c0_i32_0 = arith.constant 0 : i32
    return %arg0, %c0_i32 : i32, i32
  }
}

</mosaic_0001>

<llo_original>
// kernel: tpu_custom_call.1
$region0: #{tpu_custom_call.1}
  #allocation0 [shape = 'u32[]', space=smem, size = 0x4, offset = 0x4, fixed_abs, tag = 'smem constant byte address 0x4 - core index']
  #allocation1 [shape = 'u32[144,128]{1,0:T(1,128)}', space=vmem, size = 0x12000, scoped, tag = 'internal scratch']
  %s0 = inlined_call_operand.hbm [shape: f32[4,256], index: 0, kind: input, shape index: {}]
  %s1 = inlined_call_operand.hbm [shape: bf16[256,128], index: 1, kind: input, shape index: {}]
  %s2 = inlined_call_operand.vmem [shape: f32[1,128], index: 2, kind: input, shape index: {}]
  %s3 = inlined_call_operand.hbm [shape: f32[4,128], index: 3, kind: output, shape index: {}]
  %s4 = sld [smem:[#allocation0]]
  $region30: #{tpu_custom_call.1} parent=0
    _
  %s6 = ssub.s32 1, %s4
  %s7 = scalar_select 0, %s6, %s4
  $region1: #{tpu_custom_call.1} parent=0
    #allocation2 [shape = 'u8[8192]{0}', space=vmem, size = 0x2000, scoped, tag = 'input window, operand 0, single buffered']
    #allocation3 [shape = 's32[1]{0}', space=sflag, size = 0x4, scoped, tag = 'scoped memory for tpu_custom_call.1']
    #allocation4 [shape = 's32[1]{0}', space=sflag, size = 0x4, scoped, tag = 'scoped memory for tpu_custom_call.1']
    #allocation5 [shape = 'u8[65536]{0}', space=vmem, size = 0x10000, scoped, tag = 'input window, operand 1, single buffered']
    #allocation6 [shape = 's32[1]{0}', space=sflag, size = 0x4, scoped, tag = 'scoped memory for tpu_custom_call.1']
    #allocation7 [shape = 'u8[4096]{0}', space=vmem, size = 0x1000, scoped, tag = 'output window, operand 0, single buffered']
    %8 = vsyncpa [#allocation3], 0
    %9 = vsyncpa [#allocation6], 0
    %10 = vsyncpa [#allocation4], 0
    // Predicated region
    $region2: #{tpu_custom_call.1} parent=1 // pred_check
      _
    $region3: #{tpu_custom_call.1} parent=1 // pred_check_branch
      %12 = sbr.rel (0) target = $region5
    $region4: #{tpu_custom_call.1} parent=1 // pred_region
      %s14 = ssub.s32 256, 128
      %15 = vsyncadd [#allocation3], %s14
      %s16 = sshll.u32 [#allocation2], 4
      %s17 = int_to_ptr.vmem [resolvable:$true] %s16
      %22 = dma.hbm_to_vmem [thread:$0]  %s0, 128, %s17, [#allocation3], 128, 128, 8
    $region5: #{tpu_custom_call.1} parent=1 // pred_fallthru
      _
    // Predicated region
    $region6: #{tpu_custom_call.1} parent=1 // pred_check
      _
    $region7: #{tpu_custom_call.1} parent=1 // pred_check_branch
      %24 = sbr.rel (0) target = $region9
    $region8: #{tpu_custom_call.1} parent=1 // pred_region
      %s26 = ssub.s32 2048, 2048
      %27 = vsyncadd [#allocation6], %s26
      %s28 = sshll.u32 [#allocation5], 4
      %s29 = int_to_ptr.vmem [resolvable:$true] %s28
      %34 = dma.hbm_to_vmem [thread:$0]  %s1, 2048, %s29, [#allocation6], 64, 64, 4
    $region9: #{tpu_custom_call.1} parent=1 // pred_fallthru
      _
    // Predicated region
    $region10: #{tpu_custom_call.1} parent=1 // pred_check
      _
    $region11: #{tpu_custom_call.1} parent=1 // pred_check_branch
      %36 = sbr.rel (0) target = $region13
    $region12: #{tpu_custom_call.1} parent=1 // pred_region
      _
    $region13: #{tpu_custom_call.1} parent=1 // pred_fallthru
      _
    // Predicated region
    $region14: #{tpu_custom_call.1} parent=1 // pred_check
      _
    $region15: #{tpu_custom_call.1} parent=1 // pred_check_branch
      %38 = sbr.rel (0) target = $region17
    $region16: #{tpu_custom_call.1} parent=1 // pred_region
      %39 = dma.done [#allocation3], 256
    $region17: #{tpu_custom_call.1} parent=1 // pred_fallthru
      _
    // Predicated region
    $region18: #{tpu_custom_call.1} parent=1 // pred_check
      _
    $region19: #{tpu_custom_call.1} parent=1 // pred_check_branch
      %41 = sbr.rel (0) target = $region21
    $region20: #{tpu_custom_call.1} parent=1 // pred_region
      %42 = dma.done [#allocation6], 2048
    $region21: #{tpu_custom_call.1} parent=1 // pred_fallthru
      _
    %v44 = vld [vmem:[#allocation2] sm:$0xff]
    %v45 = vld [vmem:[#allocation2 + $0x8] sm:$0xff]
    %v48 = vcombine.low %v44, %v45
    %v49 = vcombine.high %v44, %v45
    %v52 = vpack.c.bf16 %v48, %v48
    %v53 = vpack.c.bf16 %v49, %v49
    %v54 = vld [vmem:[#allocation5] sm:$0xf]
    %v55 = vld [vmem:[#allocation5 + $0x4] sm:$0xf]
    %v56 = vld [vmem:[#allocation5 + $0x8] sm:$0xf]
    %v57 = vld [vmem:[#allocation5 + $0xc] sm:$0xf]
    %v58 = vld [vmem:[#allocation5 + $0x10] sm:$0xf]
    %v59 = vld [vmem:[#allocation5 + $0x14] sm:$0xf]
    %v60 = vld [vmem:[#allocation5 + $0x18] sm:$0xf]
    %v61 = vld [vmem:[#allocation5 + $0x1c] sm:$0xf]
    %v62 = vld [vmem:[#allocation5 + $0x20] sm:$0xf]
    %v63 = vld [vmem:[#allocation5 + $0x24] sm:$0xf]
    %v64 = vld [vmem:[#allocation5 + $0x28] sm:$0xf]
    %v65 = vld [vmem:[#allocation5 + $0x2c] sm:$0xf]
    %v66 = vld [vmem:[#allocation5 + $0x30] sm:$0xf]
    %v67 = vld [vmem:[#allocation5 + $0x34] sm:$0xf]
    %v68 = vld [vmem:[#allocation5 + $0x38] sm:$0xf]
    %v69 = vld [vmem:[#allocation5 + $0x3c] sm:$0xf]
    %v70 = vld [vmem:[#allocation5 + $0x40] sm:$0xf]
    %v71 = vld [vmem:[#allocation5 + $0x44] sm:$0xf]
    %v72 = vld [vmem:[#allocation5 + $0x48] sm:$0xf]
    %v73 = vld [vmem:[#allocation5 + $0x4c] sm:$0xf]
    %v74 = vld [vmem:[#allocation5 + $0x50] sm:$0xf]
    %v75 = vld [vmem:[#allocation5 + $0x54] sm:$0xf]
    %v76 = vld [vmem:[#allocation5 + $0x58] sm:$0xf]
    %v77 = vld [vmem:[#allocation5 + $0x5c] sm:$0xf]
    %v78 = vld [vmem:[#allocation5 + $0x60] sm:$0xf]
    %v79 = vld [vmem:[#allocation5 + $0x64] sm:$0xf]
    %v80 = vld [vmem:[#allocation5 + $0x68] sm:$0xf]
    %v81 = vld [vmem:[#allocation5 + $0x6c] sm:$0xf]
    %v82 = vld [vmem:[#allocation5 + $0x70] sm:$0xf]
    %v83 = vld [vmem:[#allocation5 + $0x74] sm:$0xf]
    %v84 = vld [vmem:[#allocation5 + $0x78] sm:$0xf]
    %v85 = vld [vmem:[#allocation5 + $0x7c] sm:$0xf]
    %v86 = vld [vmem:[%s2] sm:$0x1]
    %v88 = vlaneseq
    %v89 = vshrl.u32 %v88, 7
    %v90 = vsub.s32 0, %v89
    %v91 = vrot.slane %v86, %v90
    %v125 = vunpack.c.l.b16 %v54
    %v126 = vunpack.c.l.b16 %v55
    %v127 = vunpack.c.l.b16 %v56
    %v128 = vunpack.c.l.b16 %v57
    %v129 = vunpack.c.l.b16 %v58
    %v130 = vunpack.c.l.b16 %v59
    %v131 = vunpack.c.l.b16 %v60
    %v132 = vunpack.c.l.b16 %v61
    %v133 = vunpack.c.l.b16 %v62
    %v134 = vunpack.c.l.b16 %v63
    %v135 = vunpack.c.l.b16 %v64
    %v136 = vunpack.c.l.b16 %v65
    %v137 = vunpack.c.l.b16 %v66
    %v138 = vunpack.c.l.b16 %v67
    %v139 = vunpack.c.l.b16 %v68
    %v140 = vunpack.c.l.b16 %v69
    %v141 = vunpack.c.l.b16 %v70
    %v142 = vunpack.c.l.b16 %v71
    %v143 = vunpack.c.l.b16 %v72
    %v144 = vunpack.c.l.b16 %v73
    %v145 = vunpack.c.l.b16 %v74
    %v146 = vunpack.c.l.b16 %v75
    %v147 = vunpack.c.l.b16 %v76
    %v148 = vunpack.c.l.b16 %v77
    %v149 = vunpack.c.l.b16 %v78
    %v150 = vunpack.c.l.b16 %v79
    %v151 = vunpack.c.l.b16 %v80
    %v152 = vunpack.c.l.b16 %v81
    %v153 = vunpack.c.l.b16 %v82
    %v154 = vunpack.c.l.b16 %v83
    %v155 = vunpack.c.l.b16 %v84
    %v156 = vunpack.c.l.b16 %v85
    %v157 = vpack.c.b16 %v126, %v125
    %v158 = vpack.c.b16 %v128, %v127
    %v159 = vpack.c.b16 %v130, %v129
    %v160 = vpack.c.b16 %v132, %v131
    %v161 = vpack.c.b16 %v134, %v133
    %v162 = vpack.c.b16 %v136, %v135
    %v163 = vpack.c.b16 %v138, %v137
    %v164 = vpack.c.b16 %v140, %v139
    %v165 = vpack.c.b16 %v142, %v141
    %v166 = vpack.c.b16 %v144, %v143
    %v167 = vpack.c.b16 %v146, %v145
    %v168 = vpack.c.b16 %v148, %v147
    %v169 = vpack.c.b16 %v150, %v149
    %v170 = vpack.c.b16 %v152, %v151
    %v171 = vpack.c.b16 %v154, %v153
    %v172 = vpack.c.b16 %v156, %v155
    %189 = vmatprep.subr.bf16.mxu0 0
    %190 = vmatpush1.bf16.msra.mxu0 %v157
    %191 = vmatprep.subr.bf16.mxu0 0
    %192 = vmatpush1.bf16.msra.mxu0 %v158
    %193 = vmatprep.subr.bf16.mxu0 0
    %194 = vmatpush1.bf16.msra.mxu0 %v159
    %195 = vmatprep.subr.bf16.mxu0 0
    %196 = vmatpush1.bf16.msra.mxu0 %v160
    %197 = vmatprep.subr.bf16.mxu0 0
    %198 = vmatpush1.bf16.msra.mxu0 %v161
    %199 = vmatprep.subr.bf16.mxu0 0
    %200 = vmatpush1.bf16.msra.mxu0 %v162
    %201 = vmatprep.subr.bf16.mxu0 0
    %202 = vmatpush1.bf16.msra.mxu0 %v163
    %203 = vmatprep.subr.bf16.mxu0 0
    %204 = vmatpush1.bf16.msra.mxu0 %v164
    %205 = vmatprep.subr.bf16.mxu0 0
    %206 = vmatpush1.bf16.msra.mxu0 %v165
    %207 = vmatprep.subr.bf16.mxu0 0
    %208 = vmatpush1.bf16.msra.mxu0 %v166
    %209 = vmatprep.subr.bf16.mxu0 0
    %210 = vmatpush1.bf16.msra.mxu0 %v167
    %211 = vmatprep.subr.bf16.mxu0 0
    %212 = vmatpush1.bf16.msra.mxu0 %v168
    %213 = vmatprep.subr.bf16.mxu0 0
    %214 = vmatpush1.bf16.msra.mxu0 %v169
    %215 = vmatprep.subr.bf16.mxu0 0
    %216 = vmatpush1.bf16.msra.mxu0 %v170
    %217 = vmatprep.subr.bf16.mxu0 0
    %218 = vmatpush1.bf16.msra.mxu0 %v171
    %219 = vmatprep.subr.bf16.mxu0 0
    %220 = vmatpush1.bf16.msra.mxu0 %v172
    %221 = vmatprep.mubr.bf16.mxu0 %v53
    %222 = vmatmul.mubr.bf16.gmra.mrb[0].mxu0 %v52
    %v223 = vpop.f32.mrb[0].mxu0
    %v224 = vadd.f32 %v91, %v223
    %v225 = vpop.f32.mrb[0].mxu0
    %v226 = vpop.f32.mrb[0].mxu0
    %v227 = vpop.f32.mrb[0].mxu0
    %228 = vdwg.mxu0
    %229 = vst [vmem:[#allocation7] sm:$0xff] %v224
    // Predicated region
    $region22: #{tpu_custom_call.1} parent=1 // pred_check
      _
    $region23: #{tpu_custom_call.1} parent=1 // pred_check_branch
      %231 = sbr.rel (0) target = $region25
    $region24: #{tpu_custom_call.1} parent=1 // pred_region
      %s233 = ssub.s32 128, 64
      %234 = vsyncadd [#allocation4], %s233
      %s235 = sshll.u32 [#allocation7], 4
      %s236 = int_to_ptr.vmem [resolvable:$true] %s235
      %241 = dma.vmem_to_hbm [thread:$0]  %s236, 64, %s3, [#allocation4], 64, 64, 4
    $region25: #{tpu_custom_call.1} parent=1 // pred_fallthru
      _
    // Predicated region
    $region26: #{tpu_custom_call.1} parent=1 // pred_check
      _
    $region27: #{tpu_custom_call.1} parent=1 // pred_check_branch
      %243 = sbr.rel (0) target = $region29
    $region28: #{tpu_custom_call.1} parent=1 // pred_region
      %244 = dma.done [#allocation4], 128
    $region29: #{tpu_custom_call.1} parent=1 // pred_fallthru
      _
    %245 = vsyncpa [#allocation3], 1
    %246 = vsyncpa [#allocation6], 1
    %247 = vsyncpa [#allocation4], 1

</llo_original>
